<compile_context>
chip_gen: v6e
topology: v6e:2x2x1
jax: 0.10.0
libtpu: 0.0.40
codegen_flags: <defaults>
</compile_context>

<pallas_src>
import functools

import jax
import jax.numpy as jnp
from jax.experimental import pallas as pl
from jax.experimental.pallas import tpu as pltpu


def _embeddings_kernel(ids_ref, tt_ids_ref,          # scalar prefetch (SMEM)
                       pos_ref, gamma_ref, beta_ref,  # VMEM (auto-pipelined)
                       word_hbm, tt_hbm,              # HBM refs (pl.ANY)
                       o_ref,                         # output tile (TS, H)
                       wbuf, tbuf, wsem, tsem,        # scratch
                       *, eps):
    b = pl.program_id(0)
    s = pl.program_id(1)
    TS = wbuf.shape[0]
    base = s * TS

    # ---- issue all row-gather DMAs (word + token-type embeddings) ----
    @pl.loop(0, TS)
    def _(t):
        wid = ids_ref[b, base + t]
        tid = tt_ids_ref[b, base + t]
        pltpu.make_async_copy(
            word_hbm.at[pl.ds(wid, 1), :], wbuf.at[pl.ds(t, 1), :], wsem
        ).start()
        pltpu.make_async_copy(
            tt_hbm.at[pl.ds(tid, 1), :], tbuf.at[pl.ds(t, 1), :], tsem
        ).start()

    # ---- wait for all gathers ----
    @pl.loop(0, TS)
    def _(t):
        pltpu.make_async_copy(
            word_hbm.at[pl.ds(0, 1), :], wbuf.at[pl.ds(t, 1), :], wsem
        ).wait()
        pltpu.make_async_copy(
            tt_hbm.at[pl.ds(0, 1), :], tbuf.at[pl.ds(t, 1), :], tsem
        ).wait()

    # ---- sum embeddings + one-pass LayerNorm ----
    h = (wbuf[...] + tbuf[...] + pos_ref[...]).astype(jnp.float32)   # (TS, H)
    mu = jnp.mean(h, axis=-1, keepdims=True)
    var = jnp.mean(h * h, axis=-1, keepdims=True) - mu * mu
    h = (h - mu) * jax.lax.rsqrt(var + eps)
    o_ref[...] = (h * gamma_ref[...] + beta_ref[...]).astype(o_ref.dtype)
    # TODO(synk): training-mode dropout (pltpu.prng_*) not implemented; forward
    # here matches eval / inference (dropout == identity).


def bert_embeddings(input_ids, token_type_ids, params, *,
                    use_position_embeddings=True, seq_tile=128, eps=1e-12):
    """input_ids, token_type_ids: [B, S] int32 -> embeddings [B, S, H]."""
    B, S = input_ids.shape
    word_emb = params["word_emb"]        # [V, H]
    tt_emb = params["tt_emb"]            # [T, H]
    gamma = params["ln_gamma"]           # [1, H]
    beta = params["ln_beta"]             # [1, H]
    H = word_emb.shape[1]

    # Sequence tile: 128 for production shapes, fall back to full S for small demos.
    TS = seq_tile if (S % seq_tile == 0) else S

    # Default position_ids = arange(S); the lookup is then a contiguous slice
    # of the position table, expressed as a plain BlockSpec (no gather needed).
    # TODO(synk): explicit position_ids / past_key_values_length offsets not
    # supported; default BERT path only.
    if use_position_embeddings:
        pos_slice = params["pos_emb"][:S]
    else:
        pos_slice = jnp.zeros((S, H), dtype=word_emb.dtype)

    ids = input_ids.astype(jnp.int32)
    tt_ids = token_type_ids.astype(jnp.int32)

    kernel = functools.partial(_embeddings_kernel, eps=eps)

    out = pl.pallas_call(
        kernel,
        out_shape=jax.ShapeDtypeStruct((B, S, H), word_emb.dtype),
        grid_spec=pltpu.PrefetchScalarGridSpec(
            num_scalar_prefetch=2,                      # ids, tt_ids -> SMEM
            grid=(B, S // TS),
            in_specs=[
                pl.BlockSpec((TS, H), lambda b, s, ids, tt: (s, 0)),   # pos rows
                pl.BlockSpec((1, H), lambda b, s, ids, tt: (0, 0)),    # gamma
                pl.BlockSpec((1, H), lambda b, s, ids, tt: (0, 0)),    # beta
                pl.BlockSpec(memory_space=pl.ANY),                     # word table (HBM)
                pl.BlockSpec(memory_space=pl.ANY),                     # token-type table (HBM)
            ],
            out_specs=pl.BlockSpec((None, TS, H),
                                   lambda b, s, ids, tt: (b, s, 0)),
            scratch_shapes=[
                pltpu.VMEM((TS, H), word_emb.dtype),    # gathered word rows
                pltpu.VMEM((TS, H), tt_emb.dtype),      # gathered token-type rows
                pltpu.SemaphoreType.DMA,                # shared sem: word gathers
                pltpu.SemaphoreType.DMA,                # shared sem: token-type gathers
            ],
        ),
        compiler_params=pltpu.CompilerParams(
            dimension_semantics=("parallel", "parallel"),
        ),
    )(ids, tt_ids, pos_slice, gamma, beta, word_emb, tt_emb)
    return out


def _ref_forward(input_ids, token_type_ids, params, *,
                 use_position_embeddings=True, eps=1e-12):
    """Pure-JAX reference of the PyTorch module's forward (eval mode)."""
    h = params["word_emb"][input_ids] + params["tt_emb"][token_type_ids]
    if use_position_embeddings:
        S = input_ids.shape[1]
        h = h + params["pos_emb"][:S][None, :, :]
    mu = jnp.mean(h, axis=-1, keepdims=True)
    var = jnp.mean((h - mu) ** 2, axis=-1, keepdims=True)
    h = (h - mu) / jnp.sqrt(var + eps)
    return h * params["ln_gamma"][0] + params["ln_beta"][0]


if __name__ == "__main__":
    key = jax.random.PRNGKey(0)
    B, S, H = 2, 8, 32            # batch, seq, hidden
    V, T, P = 256, 2, 16          # vocab, type-vocab, max positions
    k0, k1, k2, k3, k4, k5 = jax.random.split(key, 6)

    input_ids = jax.random.randint(k0, (B, S), 0, V, dtype=jnp.int32)
    token_type_ids = jax.random.randint(k1, (B, S), 0, T, dtype=jnp.int32)

    params = {
        "word_emb": 0.02 * jax.random.normal(k2, (V, H), dtype=jnp.float32),
        "tt_emb": 0.02 * jax.random.normal(k3, (T, H), dtype=jnp.float32),
        "pos_emb": 0.02 * jax.random.normal(k4, (P, H), dtype=jnp.float32),
        "ln_gamma": jnp.ones((1, H), dtype=jnp.float32)
        + 0.01 * jax.random.normal(k5, (1, H), dtype=jnp.float32),
        "ln_beta": jnp.zeros((1, H), dtype=jnp.float32),
    }

    out = bert_embeddings(input_ids, token_type_ids, params,
                          use_position_embeddings=True)
    out = jax.block_until_ready(out)

    ref = _ref_forward(input_ids, token_type_ids, params,
                       use_position_embeddings=True)
    assert out.shape == (B, S, H), out.shape
    assert jnp.allclose(out, ref, atol=1e-4, rtol=1e-4), float(
        jnp.max(jnp.abs(out - ref))
    )
    print("KERNEL_OK")
</pallas_src>

<mosaic_0001>
module attributes {stable_mosaic.version = 11 : i64} {
  func.func @_embeddings_kernel(%arg0: i32, %arg1: i32, %arg2: memref<2x8xi32, #tpu.memory_space<smem>>, %arg3: memref<2x8xi32, #tpu.memory_space<smem>>, %arg4: memref<8x32xf32, #tpu.memory_space<vmem>>, %arg5: memref<1x32xf32, #tpu.memory_space<vmem>>, %arg6: memref<1x32xf32, #tpu.memory_space<vmem>>, %arg7: memref<256x32xf32, #tpu.memory_space<any>>, %arg8: memref<2x32xf32, #tpu.memory_space<any>>, %arg9: memref<1x8x32xf32, #tpu.memory_space<vmem>>, %arg10: memref<8x32xf32, #tpu.memory_space<vmem>>, %arg11: memref<8x32xf32, #tpu.memory_space<vmem>>, %arg12: memref<!tpu.dma_semaphore, #tpu.memory_space<semaphore_mem>>, %arg13: memref<!tpu.dma_semaphore, #tpu.memory_space<semaphore_mem>>) attributes {dimension_semantics = [#tpu.dimension_semantics<parallel>, #tpu.dimension_semantics<parallel>], iteration_bounds = array<i64: 2, 1>, scalar_prefetch = 2 : i64, scratch_operands = 4 : i64, tpu.core_type = #tpu.core_type<tc>, window_params = [{transform_indices = @transform_0, window_bounds = array<i64: 8, 32>}, {pipeline_mode = #tpu.pipeline_mode<synchronous>, transform_indices = @transform_1, window_bounds = array<i64: 1, 32>}, {pipeline_mode = #tpu.pipeline_mode<synchronous>, transform_indices = @transform_2, window_bounds = array<i64: 1, 32>}, {}, {}, {transform_indices = @transform_5, window_bounds = array<i64: 1, 8, 32>}]} {
    %c8_i32 = arith.constant 8 : i32
    %0 = arith.muli %arg1, %c8_i32 : i32
    %c0_i32 = arith.constant 0 : i32
    %c8_i32_0 = arith.constant 8 : i32
    %1 = arith.addi %c0_i32, %c8_i32_0 : i32
    %c1_i32 = arith.constant 1 : i32
    scf.for %arg14 = %c0_i32 to %1 step %c1_i32  : i32 {
      %c1_i32_22 = arith.constant 1 : i32
      %35 = arith.muli %arg14, %c1_i32_22 : i32
      %c0_i32_23 = arith.constant 0 : i32
      %36 = arith.addi %c0_i32_23, %35 : i32
      %37 = arith.addi %0, %36 : i32
      %38 = arith.index_cast %arg0 : i32 to index
      %39 = arith.index_cast %37 : i32 to index
      %40 = memref.load %arg2[%38, %39] : memref<2x8xi32, #tpu.memory_space<smem>>
      %41 = arith.addi %0, %36 : i32
      %42 = arith.index_cast %arg0 : i32 to index
      %43 = arith.index_cast %41 : i32 to index
      %44 = memref.load %arg3[%42, %43] : memref<2x8xi32, #tpu.memory_space<smem>>
      %c0_i32_24 = arith.constant 0 : i32
      %45 = tpu.memref_slice %arg7[%40, %c0_i32_24] : memref<256x32xf32, #tpu.memory_space<any>> -> memref<1x32xf32, #tpu.memory_space<any>>
      %c0_i32_25 = arith.constant 0 : i32
      %46 = tpu.memref_slice %arg10[%36, %c0_i32_25] : memref<8x32xf32, #tpu.memory_space<vmem>> -> memref<1x32xf32, #tpu.memory_space<vmem>>
      tpu.enqueue_dma source(%45 : memref<1x32xf32, #tpu.memory_space<any>>) target(%46 : memref<1x32xf32, #tpu.memory_space<vmem>>) target_semaphore(%arg12 : memref<!tpu.dma_semaphore, #tpu.memory_space<semaphore_mem>>)
      %c0_i32_26 = arith.constant 0 : i32
      %47 = tpu.memref_slice %arg8[%44, %c0_i32_26] : memref<2x32xf32, #tpu.memory_space<any>> -> memref<1x32xf32, #tpu.memory_space<any>>
      %c0_i32_27 = arith.constant 0 : i32
      %48 = tpu.memref_slice %arg11[%36, %c0_i32_27] : memref<8x32xf32, #tpu.memory_space<vmem>> -> memref<1x32xf32, #tpu.memory_space<vmem>>
      tpu.enqueue_dma source(%47 : memref<1x32xf32, #tpu.memory_space<any>>) target(%48 : memref<1x32xf32, #tpu.memory_space<vmem>>) target_semaphore(%arg13 : memref<!tpu.dma_semaphore, #tpu.memory_space<semaphore_mem>>)
    }
    %c8_i32_1 = arith.constant 8 : i32
    %c0_i32_2 = arith.constant 0 : i32
    %c8_i32_3 = arith.constant 8 : i32
    %2 = arith.addi %c0_i32_2, %c8_i32_3 : i32
    %c1_i32_4 = arith.constant 1 : i32
    scf.for %arg14 = %c0_i32_2 to %2 step %c1_i32_4  : i32 {
      %c1_i32_22 = arith.constant 1 : i32
      %35 = arith.muli %arg14, %c1_i32_22 : i32
      %c0_i32_23 = arith.constant 0 : i32
      %36 = arith.addi %c0_i32_23, %35 : i32
      %c0_i32_24 = arith.constant 0 : i32
      %c0_i32_25 = arith.constant 0 : i32
      %37 = tpu.memref_slice %arg7[%c0_i32_24, %c0_i32_25] : memref<256x32xf32, #tpu.memory_space<any>> -> memref<1x32xf32, #tpu.memory_space<any>>
      %c0_i32_26 = arith.constant 0 : i32
      %38 = tpu.memref_slice %arg10[%36, %c0_i32_26] : memref<8x32xf32, #tpu.memory_space<vmem>> -> memref<1x32xf32, #tpu.memory_space<vmem>>
      tpu.wait_dma2 semaphore(%arg12 : memref<!tpu.dma_semaphore, #tpu.memory_space<semaphore_mem>>) src(%37 : memref<1x32xf32, #tpu.memory_space<any>>) dst(%38 : memref<1x32xf32, #tpu.memory_space<vmem>>)
      %c0_i32_27 = arith.constant 0 : i32
      %c0_i32_28 = arith.constant 0 : i32
      %39 = tpu.memref_slice %arg8[%c0_i32_27, %c0_i32_28] : memref<2x32xf32, #tpu.memory_space<any>> -> memref<1x32xf32, #tpu.memory_space<any>>
      %c0_i32_29 = arith.constant 0 : i32
      %40 = tpu.memref_slice %arg11[%36, %c0_i32_29] : memref<8x32xf32, #tpu.memory_space<vmem>> -> memref<1x32xf32, #tpu.memory_space<vmem>>
      tpu.wait_dma2 semaphore(%arg13 : memref<!tpu.dma_semaphore, #tpu.memory_space<semaphore_mem>>) src(%39 : memref<1x32xf32, #tpu.memory_space<any>>) dst(%40 : memref<1x32xf32, #tpu.memory_space<vmem>>)
    }
    %c8_i32_5 = arith.constant 8 : i32
    %c0 = arith.constant 0 : index
    %c0_6 = arith.constant 0 : index
    %3 = vector.load %arg10[%c0, %c0_6] : memref<8x32xf32, #tpu.memory_space<vmem>>, vector<8x32xf32>
    %c0_7 = arith.constant 0 : index
    %c0_8 = arith.constant 0 : index
    %4 = vector.load %arg11[%c0_7, %c0_8] : memref<8x32xf32, #tpu.memory_space<vmem>>, vector<8x32xf32>
    %5 = arith.addf %3, %4 : vector<8x32xf32>
    %c0_9 = arith.constant 0 : index
    %c0_10 = arith.constant 0 : index
    %6 = vector.load %arg4[%c0_9, %c0_10] : memref<8x32xf32, #tpu.memory_space<vmem>>, vector<8x32xf32>
    %7 = arith.addf %5, %6 : vector<8x32xf32>
    %cst = arith.constant dense<0.000000e+00> : vector<8xf32>
    %8 = vector.multi_reduction <add>, %7, %cst [1] : vector<8x32xf32> to vector<8xf32>
    %9 = vector.shape_cast %8 : vector<8xf32> to vector<8x1xf32>
    %cst_11 = arith.constant 3.200000e+01 : f32
    %10 = vector.broadcast %cst_11 : f32 to vector<8x1xf32>
    %11 = arith.divf %9, %10 : vector<8x1xf32>
    %12 = arith.mulf %7, %7 : vector<8x32xf32>
    %cst_12 = arith.constant dense<0.000000e+00> : vector<8xf32>
    %13 = vector.multi_reduction <add>, %12, %cst_12 [1] : vector<8x32xf32> to vector<8xf32>
    %14 = vector.shape_cast %13 : vector<8xf32> to vector<8x1xf32>
    %cst_13 = arith.constant 3.200000e+01 : f32
    %15 = vector.broadcast %cst_13 : f32 to vector<8x1xf32>
    %16 = arith.divf %14, %15 : vector<8x1xf32>
    %17 = arith.mulf %11, %11 : vector<8x1xf32>
    %18 = arith.subf %16, %17 : vector<8x1xf32>
    %19 = vector.broadcast %11 : vector<8x1xf32> to vector<8x32xf32>
    %20 = arith.subf %7, %19 : vector<8x32xf32>
    %cst_14 = arith.constant 9.99999996E-13 : f32
    %21 = vector.broadcast %cst_14 : f32 to vector<8x1xf32>
    %22 = arith.addf %18, %21 : vector<8x1xf32>
    %23 = math.rsqrt %22 : vector<8x1xf32>
    %24 = vector.broadcast %23 : vector<8x1xf32> to vector<8x32xf32>
    %25 = arith.mulf %20, %24 : vector<8x32xf32>
    %c0_15 = arith.constant 0 : index
    %c0_16 = arith.constant 0 : index
    %26 = vector.load %arg5[%c0_15, %c0_16] : memref<1x32xf32, #tpu.memory_space<vmem>>, vector<1x32xf32>
    %27 = vector.broadcast %26 : vector<1x32xf32> to vector<8x32xf32>
    %28 = arith.mulf %25, %27 : vector<8x32xf32>
    %c0_17 = arith.constant 0 : index
    %c0_18 = arith.constant 0 : index
    %29 = vector.load %arg6[%c0_17, %c0_18] : memref<1x32xf32, #tpu.memory_space<vmem>>, vector<1x32xf32>
    %30 = vector.broadcast %29 : vector<1x32xf32> to vector<8x32xf32>
    %31 = arith.addf %28, %30 : vector<8x32xf32>
    %c0_19 = arith.constant 0 : index
    %c0_20 = arith.constant 0 : index
    %c0_21 = arith.constant 0 : index
    %32 = vector.load %arg9[%c0_19, %c0_20, %c0_21] : memref<1x8x32xf32, #tpu.memory_space<vmem>>, vector<1x8x32xf32>
    %33 = vector.shape_cast %32 : vector<1x8x32xf32> to vector<8x32xf32>
    %34 = vector.shape_cast %31 : vector<8x32xf32> to vector<1x8x32xf32>
    tpu.vector_store %arg9[%c0_19, %c0_20, %c0_21], %34 {strides = array<i32>} : memref<1x8x32xf32, #tpu.memory_space<vmem>>, vector<1x8x32xf32>,
    return
  }
  func.func @transform_0(%arg0: i32, %arg1: i32, %arg2: memref<2x8xi32, #tpu.memory_space<smem>>, %arg3: memref<2x8xi32, #tpu.memory_space<smem>>) -> (i32, i32) {
    %c0_i32 = arith.constant 0 : i32
    %c0_i32_0 = arith.constant 0 : i32
    return %arg1, %c0_i32 : i32, i32
  }
  func.func @transform_1(%arg0: i32, %arg1: i32, %arg2: memref<2x8xi32, #tpu.memory_space<smem>>, %arg3: memref<2x8xi32, #tpu.memory_space<smem>>) -> (i32, i32) {
    %c0_i32 = arith.constant 0 : i32
    %c0_i32_0 = arith.constant 0 : i32
    %c0_i32_1 = arith.constant 0 : i32
    return %c0_i32, %c0_i32_0 : i32, i32
  }
  func.func @transform_2(%arg0: i32, %arg1: i32, %arg2: memref<2x8xi32, #tpu.memory_space<smem>>, %arg3: memref<2x8xi32, #tpu.memory_space<smem>>) -> (i32, i32) {
    %c0_i32 = arith.constant 0 : i32
    %c0_i32_0 = arith.constant 0 : i32
    %c0_i32_1 = arith.constant 0 : i32
    return %c0_i32, %c0_i32_0 : i32, i32
  }
  func.func @transform_5(%arg0: i32, %arg1: i32, %arg2: memref<2x8xi32, #tpu.memory_space<smem>>, %arg3: memref<2x8xi32, #tpu.memory_space<smem>>) -> (i32, i32, i32) {
    %c0_i32 = arith.constant 0 : i32
    %c0_i32_0 = arith.constant 0 : i32
    return %arg0, %arg1, %c0_i32 : i32, i32, i32
  }
}

</mosaic_0001>

<llo_original>
// kernel: tpu_custom_call.1
$region0: #{tpu_custom_call.1}
  #allocation0 [shape = 'u32[]', space=smem, size = 0x4, offset = 0x4, fixed_abs, tag = 'smem constant byte address 0x4 - core index']
  #allocation1 [shape = 'u32[144,128]{1,0:T(1,128)}', space=vmem, size = 0x12000, scoped, tag = 'internal scratch']
  #allocation2 [shape = 'f32[8,32]{1,0:T(8,128)}', space=vmem, size = 0x1000, scoped, tag = 'scratch operand']
  #allocation3 [shape = 'f32[8,32]{1,0:T(8,128)}', space=vmem, size = 0x1000, scoped, tag = 'scratch operand']
  #allocation4 [shape = 's32[1]{0}', space=sflag, size = 0x4, scoped, tag = 'scratch operand']
  #allocation5 [shape = 's32[1]{0}', space=sflag, size = 0x4, scoped, tag = 'scratch operand']
  #allocation6 [shape = 's32[1]{0}', space=sflag, size = 0x4, scoped, tag = 'scoped memory for tpu_custom_call.1']
  #allocation7 [shape = 'u8[1024]{0}', space=smem, size = 0x400, scoped, tag = 'prefetched SMEM operand 0']
  #allocation8 [shape = 'u8[1024]{0}', space=smem, size = 0x400, scoped, tag = 'prefetched SMEM operand 1']
  #allocation11 [shape = 's32[]', space=sflag, size = 0x4, offset = 0, fixed_abs, tag = 'sflag constant byte address 0x0 - dummy sync flag']
  #allocation12 [shape = 's32[]', space=sflag, size = 0x4, offset = 0, fixed_abs, tag = 'sflag constant byte address 0x0 - dummy sync flag']
  %s0 = inlined_call_operand.vmem [shape: s32[2,8], index: 0, kind: input, shape index: {}]
  %s1 = inlined_call_operand.vmem [shape: s32[2,8], index: 1, kind: input, shape index: {}]
  %s2 = inlined_call_operand.vmem [shape: f32[8,32], index: 2, kind: input, shape index: {}]
  %s3 = inlined_call_operand.vmem [shape: f32[1,32], index: 3, kind: input, shape index: {}]
  %s4 = inlined_call_operand.vmem [shape: f32[1,32], index: 4, kind: input, shape index: {}]
  %s5 = inlined_call_operand.vmem [shape: f32[256,32], index: 5, kind: input, shape index: {}]
  %s6 = inlined_call_operand.vmem [shape: f32[2,32], index: 6, kind: input, shape index: {}]
  %s7 = inlined_call_operand.hbm [shape: f32[2,8,32], index: 7, kind: output, shape index: {}]
  %s8 = sld [smem:[#allocation0]]
  $region119: #{tpu_custom_call.1} parent=0
    _
  %s10 = ssub.s32 1, %s8
  %s11 = scalar_select 0, %s10, %s8
  %s12 = sshll.u32 %s0, 4
  %s13 = int_to_ptr.vmem [resolvable:$true] %s12
  %15 = dma.vmem_to_smem %s13, 32, [#allocation7], [#allocation6]
  %s16 = sshll.u32 %s1, 4
  %s17 = int_to_ptr.vmem [resolvable:$true] %s16
  %19 = dma.vmem_to_smem %s17, 32, [#allocation8], [#allocation6]
  %20 = dma.done [#allocation6], 64
  %21 = sfence
  $region1: #{tpu_custom_call.1} parent=0
    #allocation9 [shape = 'u8[8192]{0}', space=vmem, size = 0x2000, scoped, tag = 'output window, operand 0']
    #allocation10 [shape = 's32[2]{0}', space=sflag, size = 0x8, scoped, tag = 'scoped memory for tpu_custom_call.1']
    %22 = vsyncpa [#allocation10], 0
    %s23 = scalar_lea.sflag [#allocation10], 1
    %24 = vsyncpa %s23, 0
    loop: start=0, step=1, limit=4
    $region2: #{tpu_custom_call.1} parent=1 // loop_pre_header
      _
    $region3: #{tpu_custom_call.1} parent=1 // loop_header
      %s26 = sphi 0, %s30
      %p27 = scmp.ge.s32.totalorder %s26, 4
      %s33 = sphi 0, %s45
      %s34 = sphi 0, %s41
      %s35 = sphi 0, %s33
      %s36 = sphi 0, %s34
      %s37 = sphi 0, %s35
      %s38 = sphi 0, %s36
      %s48 = sphi 0, %s50
      %s51 = sphi 0, %s48
      %s52 = sphi 0, %s51
      %s68 = sphi 0, %s52
      %s72 = sphi 0, %s72
      %s74 = sphi 0, %s72
      %s75 = sphi 0, %s74
      %s89 = sphi 0, %s75
      %s93 = sphi 0, %s93
      %s95 = sphi 0, %s93
      %s96 = sphi 0, %s95
      %s110 = sphi 0, %s96
      %s118 = sphi 0, %s120
      %s121 = sphi 0, %s118
      %s122 = sphi 0, %s121
      %s138 = sphi 0, %s122
    $region4: #{tpu_custom_call.1} parent=1 // loop_header_branch
      %29 = sbr.rel (%p27) target = $region8
    $region5: #{tpu_custom_call.1} parent=1 // loop_body
      %s31 = ssub.s32 %s26, 1
      %s32 = ssub.s32 %s26, 2
      %s39 = sadd.s32 1, %s34
      %p40 = scmp.ge.s32.totalorder %s39, 1
      %s41 = scalar_select %p40, 0, %s39
      %s42 = sadd.s32 1, %s33
      %s43 = scalar_select %p40, %s42, %s33
      %p44 = scmp.ge.s32.totalorder %s43, 2
      %s45 = scalar_select %p44, 0, %s43
      %s46 = ssub.s32 %s34, %s41
      %p47 = scmp.eq.s32.totalorder %s46, 0
      %s49 = sadd.s32 %s48, 1
      %s50 = scalar_select %p47, %s48, %s49
      %p53 = pneg %p47
      %p54 = scmp.eq.s32.totalorder %s26, 1
      %p55 = por %p53, %p54
      %p56 = scmp.ne.s32.totalorder %s48, %s51
      %p57 = scmp.eq.s32.totalorder %s26, 0
      %p58 = por %p56, %p57
      %p59 = scmp.ne.s32.totalorder %s48, %s51
      %p60 = scmp.eq.s32.totalorder %s31, 1
      %p61 = por %p59, %p60
      %p62 = scmp.ne.s32.totalorder %s51, %s52
      %p63 = scmp.eq.s32.totalorder %s31, 0
      %p64 = por %p62, %p63
      %p65 = scmp.ne.s32.totalorder %s51, %s52
      %p66 = scmp.eq.s32.totalorder %s32, 1
      %p67 = por %p65, %p66
      %p69 = scmp.ne.s32.totalorder %s52, %s68
      %p70 = scmp.eq.s32.totalorder %s32, 0
      %p71 = por %p69, %p70
      %s73 = sadd.s32 %s72, 1
      %p76 = scmp.eq.s32.totalorder %s26, 1
      %p77 = scmp.ne.s32.totalorder %s72, %s74
      %p78 = scmp.eq.s32.totalorder %s26, 0
      %p79 = por %p77, %p78
      %p80 = scmp.ne.s32.totalorder %s72, %s74
      %p81 = scmp.eq.s32.totalorder %s31, 1
      %p82 = por %p80, %p81
      %p83 = scmp.ne.s32.totalorder %s74, %s75
      %p84 = scmp.eq.s32.totalorder %s31, 0
      %p85 = por %p83, %p84
      %p86 = scmp.ne.s32.totalorder %s74, %s75
      %p87 = scmp.eq.s32.totalorder %s32, 1
      %p88 = por %p86, %p87
      %p90 = scmp.ne.s32.totalorder %s75, %s89
      %p91 = scmp.eq.s32.totalorder %s32, 0
      %p92 = por %p90, %p91
      %s94 = sadd.s32 %s93, 1
      %p97 = scmp.eq.s32.totalorder %s26, 1
      %p98 = scmp.ne.s32.totalorder %s93, %s95
      %p99 = scmp.eq.s32.totalorder %s26, 0
      %p100 = por %p98, %p99
      %p101 = scmp.ne.s32.totalorder %s93, %s95
      %p102 = scmp.eq.s32.totalorder %s31, 1
      %p103 = por %p101, %p102
      %p104 = scmp.ne.s32.totalorder %s95, %s96
      %p105 = scmp.eq.s32.totalorder %s31, 0
      %p106 = por %p104, %p105
      %p107 = scmp.ne.s32.totalorder %s95, %s96
      %p108 = scmp.eq.s32.totalorder %s32, 1
      %p109 = por %p107, %p108
      %p111 = scmp.ne.s32.totalorder %s96, %s110
      %p112 = scmp.eq.s32.totalorder %s32, 0
      %p113 = por %p111, %p112
      %s114 = ssub.s32 %s33, %s45
      %s115 = ssub.s32 %s34, %s41
      %s116 = sor.u32 %s114, %s115
      %p117 = scmp.eq.s32.totalorder %s116, 0
      %s119 = sadd.s32 %s118, 1
      %s120 = scalar_select %p117, %s118, %s119
      %p123 = pneg %p117
      %p124 = scmp.eq.s32.totalorder %s26, 1
      %p125 = por %p123, %p124
      %p126 = scmp.ne.s32.totalorder %s118, %s121
      %p127 = scmp.eq.s32.totalorder %s26, 0
      %p128 = por %p126, %p127
      %p129 = scmp.ne.s32.totalorder %s118, %s121
      %p130 = scmp.eq.s32.totalorder %s31, 1
      %p131 = por %p129, %p130
      %p132 = scmp.ne.s32.totalorder %s121, %s122
      %p133 = scmp.eq.s32.totalorder %s31, 0
      %p134 = por %p132, %p133
      %p135 = scmp.ne.s32.totalorder %s121, %s122
      %p136 = scmp.eq.s32.totalorder %s32, 1
      %p137 = por %p135, %p136
      %p139 = scmp.ne.s32.totalorder %s122, %s138
      %p140 = scmp.eq.s32.totalorder %s32, 0
      %p141 = por %p139, %p140
      %p142 = scmp.le.s32.totalorder 1, %s26
      %p143 = scmp.lt.s32.totalorder %s26, 3
      %p144 = pnand %p142, %p143
      %p145 = pneg %p144
      // Predicated region
      $region9: #{tpu_custom_call.1} parent=5 // pred_check
        _
      $region10: #{tpu_custom_call.1} parent=5 // pred_check_branch
        %147 = sbr.rel (%p144) target = $region12
      $region11: #{tpu_custom_call.1} parent=5 // pred_region
        %s148 = ssub.s32 %s26, 1
        // Predicated region
        $region13: #{tpu_custom_call.1} parent=11 // pred_check
          %p149 = pneg %p64
        $region14: #{tpu_custom_call.1} parent=11 // pred_check_branch
          %151 = sbr.rel (%p149) target = $region16
        $region15: #{tpu_custom_call.1} parent=11 // pred_region
          %p152 = scmp.lt.s32.totalorder %s36, 0
          %s153 = scalar_select %p152, %s36, 0
          %s154 = smul.addr %s153, 8
          %s155 = scalar_lea.vmem %s2, %s154
        $region16: #{tpu_custom_call.1} parent=11 // pred_fallthru
          _
        // Predicated region
        $region17: #{tpu_custom_call.1} parent=11 // pred_check
          %p156 = pneg %p85
        $region18: #{tpu_custom_call.1} parent=11 // pred_check_branch
          %158 = sbr.rel (%p156) target = $region20
        $region19: #{tpu_custom_call.1} parent=11 // pred_region
          _
        $region20: #{tpu_custom_call.1} parent=11 // pred_fallthru
          _
        // Predicated region
        $region21: #{tpu_custom_call.1} parent=11 // pred_check
          %p159 = pneg %p106
        $region22: #{tpu_custom_call.1} parent=11 // pred_check_branch
          %161 = sbr.rel (%p159) target = $region24
        $region23: #{tpu_custom_call.1} parent=11 // pred_region
          _
        $region24: #{tpu_custom_call.1} parent=11 // pred_fallthru
          _
      $region12: #{tpu_custom_call.1} parent=5 // pred_fallthru
        _
      %p162 = scmp.lt.s32.totalorder %s26, 2
      // Predicated region
      $region25: #{tpu_custom_call.1} parent=5 // pred_check
        %p163 = pneg %p162
      $region26: #{tpu_custom_call.1} parent=5 // pred_check_branch
        %165 = sbr.rel (%p163) target = $region28
      $region27: #{tpu_custom_call.1} parent=5 // pred_region
        _
      $region28: #{tpu_custom_call.1} parent=5 // pred_fallthru
        _
      %p166 = scmp.le.s32.totalorder 1, %s26
      %p167 = scmp.lt.s32.totalorder %s26, 3
      %p168 = pnand %p166, %p167
      %p169 = pneg %p168
      // Predicated region
      $region29: #{tpu_custom_call.1} parent=5 // pred_check
        _
      $region30: #{tpu_custom_call.1} parent=5 // pred_check_branch
        %171 = sbr.rel (%p168) target = $region32
      $region31: #{tpu_custom_call.1} parent=5 // pred_region
        %s172 = ssub.s32 %s26, 1
        %p173 = scmp.lt.s32.totalorder %s36, 0
        %s174 = scalar_select %p173, %s36, 0
        %s175 = smul.addr %s174, 8
        %s176 = scalar_lea.vmem %s2, %s175
        %p177 = pneg %p64
        %p178 = pneg %p61
        %p179 = pneg %p85
        %p180 = pneg %p82
        %p181 = pneg %p106
        %p182 = pneg %p103
        %p183 = pneg %p134
        %p184 = pneg %p131
        %s185 = sand.u32 %s121, 1
        %s186 = scalar_lea.sflag [#allocation10], %s185
        %s187 = sand.u32 %s121, 1
        %s188 = smul.addr %s187, 8
        %s189 = scalar_lea.vmem [#allocation9], %s188
        %p190 = scmp.lt.s32.totalorder %s36, 0
        %s191 = scalar_select %p190, %s36, 0
        %s192 = smul.addr %s191, 8
        %s193 = scalar_lea.vmem %s2, %s192
        %s194 = smul.u32 %s36, 8
        loop: start=0, step=1, limit=8
        $region33: #{tpu_custom_call.1} parent=31 // loop_pre_header
          _
        $region34: #{tpu_custom_call.1} parent=31 // loop_header
          %s196 = sphi 0, %s200
          %p197 = scmp.ge.s32.totalorder %s196, 8
        $region35: #{tpu_custom_call.1} parent=31 // loop_header_branch
          %199 = sbr.rel (%p197) target = $region39
        $region36: #{tpu_custom_call.1} parent=31 // loop_body
          %s201 = sadd.s32 %s194, %s196
          %s202 = sshra.s32 %s201, 7
          %s203 = sand.u32 %s201, 127
          %s204 = sadd.s32 %s202, %s35
          %s205 = smul.u32 %s204, 128
          %s206 = sshra.s32 %s201, 7
          %s207 = sand.u32 %s201, 127
          %s208 = sadd.s32 %s205, %s207
          %s209 = sld [smem:[#allocation7 + %s208]]
          %s210 = sld [smem:[#allocation8 + %s208]]
          %s211 = scalar_lea.vmem %s5, %s209
          %s212 = scalar_lea.vmem [#allocation2], %s196
          %p214 = scmp.lt.u32.totalorder 1, 8
          %p215 = pneg %p214
          // Predicated region
          $region40: #{tpu_custom_call.1} parent=36 // pred_check
            _
          $region41: #{tpu_custom_call.1} parent=36 // pred_check_branch
            %217 = sbr.rel (%p214) target = $region43
          $region42: #{tpu_custom_call.1} parent=36 // pred_region
            %s233 = sand.u32 1, 7
            %p234 = scmp.eq.s32.totalorder %s233, 0
            %p235 = pneg %p234
            // Predicated region
            $region55: #{tpu_custom_call.1} parent=42 // pred_check
              _
            $region56: #{tpu_custom_call.1} parent=42 // pred_check_branch
              %237 = sbr.rel (%p234) target = $region58
            $region57: #{tpu_custom_call.1} parent=42 // pred_region
              %s238 = sand.u32 1, 7
              %s239 = ssub.s32 1, %s238
              %s240 = scalar_lea.vmem %s211, %s239
              %s241 = ssub.s32 1, %s238
              %s242 = scalar_lea.vmem %s212, %s241 [#allocation2]
              %s243 = sshll.u32 1, %s238
              %s244 = ssub.s32 %s243, 1
              loop: start=0, step=1, limit=1
              $region59: #{tpu_custom_call.1} parent=57 // loop_pre_header
                _
              $region60: #{tpu_custom_call.1} parent=57 // loop_header
                %s246 = sphi 0, %s250
                %p247 = scmp.ge.s32.totalorder %s246, 1
                %s251 = sphi %s240, %s240
                %s252 = sphi %s242, %s242
              $region61: #{tpu_custom_call.1} parent=57 // loop_header_branch
                %249 = sbr.rel (%p247) target = $region65
              $region62: #{tpu_custom_call.1} parent=57 // loop_body
                %v253 = vld [vmem:[%s251] sm:%s244]
                %254 = vst [vmem:[%s252] sm:%s244] %v253
              $region63: #{tpu_custom_call.1} parent=57 // loop_footer
                %s250 = sadd.s32 1, %s246
              $region64: #{tpu_custom_call.1} parent=57 // loop_footer_branch
                %245 = sbr.rel target = $region60
              $region65: #{tpu_custom_call.1} parent=57 // loop_exit
                _
            $region58: #{tpu_custom_call.1} parent=42 // pred_fallthru
              _
          $region43: #{tpu_custom_call.1} parent=36 // pred_fallthru
            _
          // Predicated region
          $region44: #{tpu_custom_call.1} parent=36 // pred_check
            %p218 = pneg %p214
          $region45: #{tpu_custom_call.1} parent=36 // pred_check_branch
            %220 = sbr.rel (%p218) target = $region47
          $region46: #{tpu_custom_call.1} parent=36 // pred_region
            %s221 = sshll.u32 1, 1
            %s222 = ssub.s32 %s221, 1
            loop: start=0, step=1, limit=1
            $region48: #{tpu_custom_call.1} parent=46 // loop_pre_header
              _
            $region49: #{tpu_custom_call.1} parent=46 // loop_header
              %s224 = sphi 0, %s228
              %p225 = scmp.ge.s32.totalorder %s224, 1
              %s229 = sphi %s211, %s211
              %s230 = sphi %s212, %s212
            $region50: #{tpu_custom_call.1} parent=46 // loop_header_branch
              %227 = sbr.rel (%p225) target = $region54
            $region51: #{tpu_custom_call.1} parent=46 // loop_body
              %v231 = vld [vmem:[%s229] sm:%s222]
              %232 = vst [vmem:[%s230] sm:%s222] %v231
            $region52: #{tpu_custom_call.1} parent=46 // loop_footer
              %s228 = sadd.s32 1, %s224
            $region53: #{tpu_custom_call.1} parent=46 // loop_footer_branch
              %223 = sbr.rel target = $region49
            $region54: #{tpu_custom_call.1} parent=46 // loop_exit
              _
          $region47: #{tpu_custom_call.1} parent=36 // pred_fallthru
            _
          // Predicated region
          $region66: #{tpu_custom_call.1} parent=36 // pred_check
            _
          $region67: #{tpu_custom_call.1} parent=36 // pred_check_branch
            %257 = sbr.rel (0) target = $region69
          $region68: #{tpu_custom_call.1} parent=36 // pred_region
            %258 = vsyncadd [#allocation4], 16
          $region69: #{tpu_custom_call.1} parent=36 // pred_fallthru
            _
          %s259 = scalar_lea.vmem %s6, %s210
          %s260 = scalar_lea.vmem [#allocation3], %s196
          %p262 = scmp.lt.u32.totalorder 1, 8
          %p263 = pneg %p262
          // Predicated region
          $region70: #{tpu_custom_call.1} parent=36 // pred_check
            _
          $region71: #{tpu_custom_call.1} parent=36 // pred_check_branch
            %265 = sbr.rel (%p262) target = $region73
          $region72: #{tpu_custom_call.1} parent=36 // pred_region
            %s281 = sand.u32 1, 7
            %p282 = scmp.eq.s32.totalorder %s281, 0
            %p283 = pneg %p282
            // Predicated region
            $region85: #{tpu_custom_call.1} parent=72 // pred_check
              _
            $region86: #{tpu_custom_call.1} parent=72 // pred_check_branch
              %285 = sbr.rel (%p282) target = $region88
            $region87: #{tpu_custom_call.1} parent=72 // pred_region
              %s286 = sand.u32 1, 7
              %s287 = ssub.s32 1, %s286
              %s288 = scalar_lea.vmem %s259, %s287
              %s289 = ssub.s32 1, %s286
              %s290 = scalar_lea.vmem %s260, %s289 [#allocation3]
              %s291 = sshll.u32 1, %s286
              %s292 = ssub.s32 %s291, 1
              loop: start=0, step=1, limit=1
              $region89: #{tpu_custom_call.1} parent=87 // loop_pre_header
                _
              $region90: #{tpu_custom_call.1} parent=87 // loop_header
                %s294 = sphi 0, %s298
                %p295 = scmp.ge.s32.totalorder %s294, 1
                %s299 = sphi %s288, %s288
                %s300 = sphi %s290, %s290
              $region91: #{tpu_custom_call.1} parent=87 // loop_header_branch
                %297 = sbr.rel (%p295) target = $region95
              $region92: #{tpu_custom_call.1} parent=87 // loop_body
                %v301 = vld [vmem:[%s299] sm:%s292]
                %302 = vst [vmem:[%s300] sm:%s292] %v301
              $region93: #{tpu_custom_call.1} parent=87 // loop_footer
                %s298 = sadd.s32 1, %s294
              $region94: #{tpu_custom_call.1} parent=87 // loop_footer_branch
                %293 = sbr.rel target = $region90
              $region95: #{tpu_custom_call.1} parent=87 // loop_exit
                _
            $region88: #{tpu_custom_call.1} parent=72 // pred_fallthru
              _
          $region73: #{tpu_custom_call.1} parent=36 // pred_fallthru
            _
          // Predicated region
          $region74: #{tpu_custom_call.1} parent=36 // pred_check
            %p266 = pneg %p262
          $region75: #{tpu_custom_call.1} parent=36 // pred_check_branch
            %268 = sbr.rel (%p266) target = $region77
          $region76: #{tpu_custom_call.1} parent=36 // pred_region
            %s269 = sshll.u32 1, 1
            %s270 = ssub.s32 %s269, 1
            loop: start=0, step=1, limit=1
            $region78: #{tpu_custom_call.1} parent=76 // loop_pre_header
              _
            $region79: #{tpu_custom_call.1} parent=76 // loop_header
              %s272 = sphi 0, %s276
              %p273 = scmp.ge.s32.totalorder %s272, 1
              %s277 = sphi %s259, %s259
              %s278 = sphi %s260, %s260
            $region80: #{tpu_custom_call.1} parent=76 // loop_header_branch
              %275 = sbr.rel (%p273) target = $region84
            $region81: #{tpu_custom_call.1} parent=76 // loop_body
              %v279 = vld [vmem:[%s277] sm:%s270]
              %280 = vst [vmem:[%s278] sm:%s270] %v279
            $region82: #{tpu_custom_call.1} parent=76 // loop_footer
              %s276 = sadd.s32 1, %s272
            $region83: #{tpu_custom_call.1} parent=76 // loop_footer_branch
              %271 = sbr.rel target = $region79
            $region84: #{tpu_custom_call.1} parent=76 // loop_exit
              _
          $region77: #{tpu_custom_call.1} parent=36 // pred_fallthru
            _
          // Predicated region
          $region96: #{tpu_custom_call.1} parent=36 // pred_check
            _
          $region97: #{tpu_custom_call.1} parent=36 // pred_check_branch
            %305 = sbr.rel (0) target = $region99
          $region98: #{tpu_custom_call.1} parent=36 // pred_region
            %306 = vsyncadd [#allocation5], 16
          $region99: #{tpu_custom_call.1} parent=36 // pred_fallthru
            _
        $region37: #{tpu_custom_call.1} parent=31 // loop_footer
          %s200 = sadd.s32 1, %s196
        $region38: #{tpu_custom_call.1} parent=31 // loop_footer_branch
          %195 = sbr.rel target = $region34
        $region39: #{tpu_custom_call.1} parent=31 // loop_exit
          _
        loop: start=0, step=1, limit=8
        $region100: #{tpu_custom_call.1} parent=31 // loop_pre_header
          _
        $region101: #{tpu_custom_call.1} parent=31 // loop_header
          %s308 = sphi 0, %s312
          %p309 = scmp.ge.s32.totalorder %s308, 8
        $region102: #{tpu_custom_call.1} parent=31 // loop_header_branch
          %311 = sbr.rel (%p309) target = $region106
        $region103: #{tpu_custom_call.1} parent=31 // loop_body
          %s313 = smul.u32 1, 1
          %s314 = sshll.u32 %s313, 4
          %315 = dma.done [#allocation4], %s314
          %s316 = sshll.u32 %s313, 4
          %317 = dma.done [#allocation5], %s316
        $region104: #{tpu_custom_call.1} parent=31 // loop_footer
          %s312 = sadd.s32 1, %s308
        $region105: #{tpu_custom_call.1} parent=31 // loop_footer_branch
          %307 = sbr.rel target = $region101
        $region106: #{tpu_custom_call.1} parent=31 // loop_exit
          _
        %v318 = vld [vmem:[#allocation2] sm:$0xff]
        %v319 = vld [vmem:[#allocation3] sm:$0xff]
        %v320 = vadd.f32 %v318, %v319
        %v321 = vld [vmem:[%s193] sm:$0xff]
        %v322 = vadd.f32 %v320, %v321
        %vm323 = vcmask 261120
        %v324 = vsel %vm323, %v322, 0.0
        %325 = vadd.xlane.f32.xlu0 %v324
        %v326 = vpop.xlane.xlu0 %325
        %v327 = vrcp.pop 32.0
        %v328 = vmul.f32 %v326, %v327
        %v329 = vmul.f32 %v322, %v322
        %v330 = vsel %vm323, %v329, 0.0
        %331 = vadd.xlane.f32.xlu0 %v330
        %v332 = vpop.xlane.xlu0 %331
        %v333 = vmul.f32 %v332, %v327
        %v334 = vmul.f32 %v328, %v328
        %v335 = vsub.f32 %v333, %v334
        %v336 = vsub.f32 %v322, %v328
        %v337 = vadd.f32 %v335, 1e-12
        %v338 = vrsqrt.pop %v337
        %v339 = vmul.f32 %v336, %v338
        %v340 = vld [vmem:[%s3] sm:$0x1]
        %v342 = vlaneseq
        %v343 = vshrl.u32 %v342, 7
        %v344 = vsub.s32 0, %v343
        %v345 = vrot.slane %v340, %v344
        %v347 = vmul.f32 %v339, %v345
        %v348 = vld [vmem:[%s4] sm:$0x1]
        %v350 = vlaneseq
        %v351 = vshrl.u32 %v350, 7
        %v352 = vsub.s32 0, %v351
        %v353 = vrot.slane %v348, %v352
        %v355 = vadd.f32 %v347, %v353
        %356 = vst.msk [vmem:[%s189] sm:$0xff] %vm323, %v355
        %s357 = sand.u32 %s121, 1
        %s358 = scalar_lea.sflag [#allocation10], %s357
        %s359 = sand.u32 %s121, 1
        %s360 = smul.addr %s359, 8
        %s361 = scalar_lea.vmem [#allocation9], %s360
        // Predicated region
        $region107: #{tpu_custom_call.1} parent=31 // pred_check
          %p362 = pneg %p131
        $region108: #{tpu_custom_call.1} parent=31 // pred_check_branch
          %364 = sbr.rel (%p362) target = $region110
        $region109: #{tpu_custom_call.1} parent=31 // pred_region
          %s366 = ssub.s32 128, 128
          %367 = vsyncadd %s358, %s366
          %s368 = sadd.s32 %s36, %s35
          %s369 = smul.addr %s368, 128
          %s370 = scalar_lea.hbm %s7, %s369
          %s372 = sshll.u32 %s361, 4
          %s373 = int_to_ptr.vmem [resolvable:$true] %s372
          %375 = dma.vmem_to_hbm [thread:$0]  %s373, 128, %s370, %s358
        $region110: #{tpu_custom_call.1} parent=31 // pred_fallthru
          _
      $region32: #{tpu_custom_call.1} parent=5 // pred_fallthru
        _
      %p376 = scmp.le.s32.totalorder 2, %s26
      // Predicated region
      $region111: #{tpu_custom_call.1} parent=5 // pred_check
        %p377 = pneg %p376
      $region112: #{tpu_custom_call.1} parent=5 // pred_check_branch
        %379 = sbr.rel (%p377) target = $region114
      $region113: #{tpu_custom_call.1} parent=5 // pred_region
        %s380 = ssub.s32 %s26, 2
        // Predicated region
        $region115: #{tpu_custom_call.1} parent=113 // pred_check
          %p381 = pneg %p137
        $region116: #{tpu_custom_call.1} parent=113 // pred_check_branch
          %383 = sbr.rel (%p381) target = $region118
        $region117: #{tpu_custom_call.1} parent=113 // pred_region
          %s384 = sand.u32 %s122, 1
          %s385 = scalar_lea.sflag [#allocation10], %s384
          %s386 = sand.u32 %s122, 1
          %s387 = smul.addr %s386, 8
          %s388 = scalar_lea.vmem [#allocation9], %s387
          %389 = dma.done %s385, 128
        $region118: #{tpu_custom_call.1} parent=113 // pred_fallthru
          _
      $region114: #{tpu_custom_call.1} parent=5 // pred_fallthru
        _
    $region6: #{tpu_custom_call.1} parent=1 // loop_footer
      %s30 = sadd.s32 1, %s26
    $region7: #{tpu_custom_call.1} parent=1 // loop_footer_branch
      %25 = sbr.rel target = $region3
    $region8: #{tpu_custom_call.1} parent=1 // loop_exit
      _
    %390 = vsyncpa [#allocation10], 1
    %s391 = scalar_lea.sflag [#allocation10], 1
    %392 = vsyncpa %s391, 1
  %393 = vsyncmov [#allocation4]
  %s394 = vpop.sfrf %393
  %p395 = scmp.eq.s32.totalorder %s394, 0
  %p396 = pneg %p395
  %398 = shalt.err (%p396)
  %399 = vsyncmov [#allocation5]
  %s400 = vpop.sfrf %399
  %p401 = scmp.eq.s32.totalorder %s400, 0
  %p402 = pneg %p401
  %404 = shalt.err (%p402)

</llo_original>
